<compile_context>
chip_gen: v7x
topology: tpu7x:2x2x1
jax: 0.10.0
libtpu: 0.0.40
codegen_flags: <defaults>
</compile_context>

<pallas_src>
import functools

import jax
import jax.numpy as jnp
from jax import lax
from jax.experimental import pallas as pl
from jax.experimental.pallas import tpu as pltpu

_RR = 21   # Gaussian ball radius (matches the PyTorch module)
_DEV = 2   # Gaussian std-dev (matches the PyTorch module)


def _coarse_heatmap_kernel(zc_ref, inv_s_ref, r2_ref, pred_ref, out_ref, acc_ref,
                           *, rr, neg_inv_two_dev2):
    """Grid = (landmark, z_tile).

    zc_ref   : SMEM (L, 1) int32   - per-landmark z centre
    inv_s_ref: SMEM (L, 1) float32 - per-landmark 1 / window_sum
    r2_ref   : VMEM (1, HW) f32    - per-landmark (x-X)^2 + (y-Y)^2, flattened
    pred_ref : VMEM (TZ, HW)       - z-tile of the predicted heatmap (native dtype)
    out_ref  : VMEM (1, 128) f32   - per-landmark loss (broadcast over lanes)
    acc_ref  : VMEM (8|TZ, HW) f32 - per-landmark elementwise partial-sum accumulator
    """
    i = pl.program_id(0)
    zi = pl.program_id(1)
    nz = pl.num_programs(1)
    tz, hw = pred_ref.shape

    @pl.when(zi == 0)
    def _init():
        acc_ref[...] = jnp.zeros_like(acc_ref)

    zc = zc_ref[i, 0]
    inv_s = inv_s_ref[i, 0]

    # z offset (relative to the landmark centre) of every row of this tile.
    dz = (lax.broadcasted_iota(jnp.int32, (tz, hw), 0)
          + (zi * tz - zc)).astype(jnp.float32)
    d2 = dz * dz + r2_ref[...]                      # exact small integers in f32
    target = jnp.where(d2 <= float(rr * rr),
                       jnp.exp(d2 * neg_inv_two_dev2), 0.0) * inv_s
    diff = jnp.abs(pred_ref[...].astype(jnp.float32) - target)

    # VPU-only partial accumulation; defer the cross-lane reduce to the last tile.
    if tz % 8 == 0:
        part = diff.reshape(tz // 8, 8, hw).sum(axis=0)  # sublane-layout preserving
    else:
        part = diff
    acc_ref[...] += part

    @pl.when(zi == nz - 1)
    def _finalize():
        out_ref[...] = jnp.full(out_ref.shape, jnp.sum(acc_ref[...]),
                                dtype=out_ref.dtype)


def _choose_z_tile(long_dim, hw, itemsize, budget_bytes):
    """Largest z-tile (multiple of 8 dividing Long, or Long itself) within budget."""
    if long_dim * hw * itemsize <= budget_bytes:
        return long_dim
    divisors = [d for d in range(8, long_dim, 8) if long_dim % d == 0]
    fitting = [d for d in divisors if d * hw * itemsize <= budget_bytes]
    if fitting:
        return max(fitting)
    return min(divisors) if divisors else long_dim


def coarse_heatmap_loss(predicted_heatmap, labels, image_scale, phase="train",
                        *, rr=_RR, dev=_DEV, tile_bytes=4 * 1024 * 1024):
    """JAX/Pallas equivalent of coarse_heatmap.forward (returns the scalar loss).

    predicted_heatmap : [landmarkNum, Long, higth, width] (float32 or bfloat16)
    labels            : [1, landmarkNum, 3] normalized landmark coordinates
    image_scale       : (Long, higth, width) - config.image_scale
    (`phase` and local_coordinate are unused, as in the PyTorch forward.)
    """
    Long, higth, width = (int(v) for v in image_scale)
    L = int(predicted_heatmap.shape[0])
    hw = higth * width
    assert predicted_heatmap.shape == (L, Long, higth, width)

    # ---- per-landmark integer centres (same rounding as np.round in torch) ----
    scale = jnp.asarray([higth - 1, width - 1, Long - 1], dtype=jnp.float32)
    labels_b = jnp.round(labels[0].astype(jnp.float32) * scale).astype(jnp.int32)  # (L,3)
    X, Y, Z = labels_b[:, 0], labels_b[:, 1], labels_b[:, 2]

    # ---- per-landmark window sum of the (possibly clipped) Gaussian ball ----
    # Only the (2*rr+1)^3 bounding box is evaluated: O(L * 43^3), negligible.
    off = jnp.arange(-rr, rr + 1, dtype=jnp.int32)
    bz, bx, by = off[:, None, None], off[None, :, None], off[None, None, :]
    bd2 = (bz * bz + bx * bx + by * by).astype(jnp.float32)
    ball = jnp.where(bd2 <= float(rr * rr),
                     jnp.exp(bd2 * (-1.0 / (2.0 * dev * dev))), 0.0)

    def _window_sum(z, x, y):
        inside = ((z + bz >= 0) & (z + bz < Long)
                  & (x + bx >= 0) & (x + bx < higth)
                  & (y + by >= 0) & (y + by < width))
        return jnp.sum(jnp.where(inside, ball, 0.0))

    sums = jax.vmap(_window_sum)(Z, X, Y)                        # (L,)
    inv_s = (1.0 / sums).astype(jnp.float32).reshape(L, 1)
    zc = Z.astype(jnp.int32).reshape(L, 1)

    # ---- per-landmark in-plane squared distance, lane-dense [L, 1, H*W] ----
    xg = jnp.arange(higth, dtype=jnp.int32)
    yg = jnp.arange(width, dtype=jnp.int32)
    dxx = xg[None, :, None] - X[:, None, None]                   # (L, H, 1)
    dyy = yg[None, None, :] - Y[:, None, None]                   # (L, 1, W)
    r2xy = (dxx * dxx + dyy * dyy).astype(jnp.float32).reshape(L, 1, hw)

    # Predicted heatmap flattened to a lane-dense slab, kept in native dtype.
    pred = predicted_heatmap.reshape(L, Long, hw)

    tz = _choose_z_tile(Long, hw, pred.dtype.itemsize, tile_bytes)
    nz = Long // tz
    acc_rows = 8 if tz % 8 == 0 else tz

    kernel = functools.partial(_coarse_heatmap_kernel, rr=rr,
                               neg_inv_two_dev2=-1.0 / (2.0 * dev * dev))

    out = pl.pallas_call(
        kernel,
        out_shape=jax.ShapeDtypeStruct((L, 1, 128), jnp.float32),
        grid=(L, nz),
        in_specs=[
            pl.BlockSpec(memory_space=pltpu.MemorySpace.SMEM),          # zc
            pl.BlockSpec(memory_space=pltpu.MemorySpace.SMEM),          # inv_s
            pl.BlockSpec((None, 1, hw), lambda i, zi: (i, 0, 0)),       # r2xy
            pl.BlockSpec((None, tz, hw), lambda i, zi: (i, zi, 0)),     # pred
        ],
        out_specs=pl.BlockSpec((None, 1, 128), lambda i, zi: (i, 0, 0)),
        scratch_shapes=[pltpu.VMEM((acc_rows, hw), jnp.float32)],
        compiler_params=pltpu.CompilerParams(
            dimension_semantics=("parallel", "arbitrary")),
    )(zc, inv_s, r2xy, pred)

    return jnp.sum(out[:, 0, 0])


def _reference_loss(predicted_heatmap, labels, image_scale, rr=_RR, dev=_DEV):
    """Pure-JAX port of the exact PyTorch forward (builds the full 2x volume + slices)."""
    Long, higth, width = image_scale
    kk = jnp.arange(2 * Long)[:, None, None]
    ii = jnp.arange(2 * higth)[None, :, None]
    jj = jnp.arange(2 * width)[None, None, :]
    # TODO(synk): MyUtils.Mydist3D is assumed to be the Euclidean 3-D distance.
    d2 = ((kk - Long) ** 2 + (ii - higth) ** 2 + (jj - width) ** 2).astype(jnp.float32)
    heatmap_gt = jnp.where(d2 <= float(rr * rr), jnp.exp(-d2 / (2.0 * dev * dev)), 0.0)

    scale = jnp.asarray([higth - 1, width - 1, Long - 1], dtype=jnp.float32)
    labels_b = jnp.round(labels * scale).astype(jnp.int32)
    X, Y, Z = labels_b[0, :, 0], labels_b[0, :, 1], labels_b[0, :, 2]

    loss = jnp.float32(0.0)
    for i in range(predicted_heatmap.shape[0]):
        win = lax.dynamic_slice(heatmap_gt,
                                (Long - Z[i], higth - X[i], width - Y[i]),
                                (Long, higth, width))
        target = win / jnp.sum(win)
        loss = loss + jnp.sum(jnp.abs(predicted_heatmap[i].astype(jnp.float32) - target))
    return loss


if __name__ == "__main__":
    key = jax.random.PRNGKey(0)
    k1, k2 = jax.random.split(key)

    landmarkNum = 3
    image_scale = (32, 32, 32)   # (Long, higth, width); must exceed rr=21 as the module assumes

    predicted_heatmap = jax.random.uniform(
        k1, (landmarkNum,) + image_scale, dtype=jnp.float32)
    labels = jax.random.uniform(k2, (1, landmarkNum, 3), dtype=jnp.float32)

    # Small tile budget so the z-tiled reduction / accumulator path is exercised (nz > 1).
    loss = coarse_heatmap_loss(predicted_heatmap, labels, image_scale,
                               tile_bytes=32 * 1024)
    loss = jax.block_until_ready(loss)

    ref = jax.block_until_ready(_reference_loss(predicted_heatmap, labels, image_scale))
    assert jnp.allclose(loss, ref, rtol=5e-4, atol=1e-2), (float(loss), float(ref))

    print("KERNEL_OK")
</pallas_src>

<mosaic_0001>
module attributes {stable_mosaic.version = 11 : i64} {
  func.func @_coarse_heatmap_kernel(%arg0: i32, %arg1: i32, %arg2: memref<3x1xi32, #tpu.memory_space<smem>>, %arg3: memref<3x1xf32, #tpu.memory_space<smem>>, %arg4: memref<1x1x1024xf32, #tpu.memory_space<vmem>>, %arg5: memref<1x8x1024xf32, #tpu.memory_space<vmem>>, %arg6: memref<1x1x128xf32, #tpu.memory_space<vmem>>, %arg7: memref<8x1024xf32, #tpu.memory_space<vmem>>) attributes {dimension_semantics = [#tpu.dimension_semantics<parallel>, #tpu.dimension_semantics<arbitrary>], iteration_bounds = array<i64: 3, 4>, scalar_prefetch = 0 : i64, scratch_operands = 1 : i64, tpu.core_type = #tpu.core_type<tc>, window_params = [{transform_indices = @transform_0, window_bounds = array<i64: 3, 1>}, {transform_indices = @transform_1, window_bounds = array<i64: 3, 1>}, {transform_indices = @transform_2, window_bounds = array<i64: 1, 1, 1024>}, {transform_indices = @transform_3, window_bounds = array<i64: 1, 8, 1024>}, {transform_indices = @transform_4, window_bounds = array<i64: 1, 1, 128>}]} {
    %c0_i32 = arith.constant 0 : i32
    %0 = arith.cmpi eq, %arg1, %c0_i32 : i32
    %1 = arith.extui %0 : i1 to i32
    %c0_i32_0 = arith.constant 0 : i32
    %2 = arith.cmpi ne, %1, %c0_i32_0 : i32
    scf.if %2 {
      %cst_16 = arith.constant 0.000000e+00 : f32
      %39 = vector.broadcast %cst_16 : f32 to vector<8x1024xf32>
      %c0_17 = arith.constant 0 : index
      %c0_18 = arith.constant 0 : index
      %40 = vector.load %arg7[%c0_17, %c0_18] : memref<8x1024xf32, #tpu.memory_space<vmem>>, vector<8x1024xf32>
      tpu.vector_store %arg7[%c0_17, %c0_18], %39 {strides = array<i32>} : memref<8x1024xf32, #tpu.memory_space<vmem>>, vector<8x1024xf32>,
    } else {
    }
    %3 = arith.index_cast %arg0 : i32 to index
    %c0 = arith.constant 0 : index
    %4 = memref.load %arg2[%3, %c0] : memref<3x1xi32, #tpu.memory_space<smem>>
    %5 = arith.index_cast %arg0 : i32 to index
    %c0_1 = arith.constant 0 : index
    %6 = memref.load %arg3[%5, %c0_1] : memref<3x1xf32, #tpu.memory_space<smem>>
    %7 = tpu.iota {dimensions = array<i32: 0>} : vector<8x1024xi32>
    %c8_i32 = arith.constant 8 : i32
    %8 = arith.muli %arg1, %c8_i32 : i32
    %9 = arith.subi %8, %4 : i32
    %10 = vector.broadcast %9 : i32 to vector<8x1024xi32>
    %11 = arith.addi %7, %10 : vector<8x1024xi32>
    %12 = arith.sitofp %11 : vector<8x1024xi32> to vector<8x1024xf32>
    %13 = arith.mulf %12, %12 : vector<8x1024xf32>
    %c0_2 = arith.constant 0 : index
    %c0_3 = arith.constant 0 : index
    %c0_4 = arith.constant 0 : index
    %14 = vector.load %arg4[%c0_2, %c0_3, %c0_4] : memref<1x1x1024xf32, #tpu.memory_space<vmem>>, vector<1x1x1024xf32>
    %15 = vector.shape_cast %14 : vector<1x1x1024xf32> to vector<1x1024xf32>
    %16 = vector.broadcast %15 : vector<1x1024xf32> to vector<8x1024xf32>
    %17 = arith.addf %13, %16 : vector<8x1024xf32>
    %cst = arith.constant 4.410000e+02 : f32
    %18 = vector.broadcast %cst : f32 to vector<8x1024xf32>
    %19 = arith.cmpf ole, %17, %18 : vector<8x1024xf32>
    %cst_5 = arith.constant -1.250000e-01 : f32
    %20 = vector.broadcast %cst_5 : f32 to vector<8x1024xf32>
    %21 = arith.mulf %17, %20 : vector<8x1024xf32>
    %22 = math.exp %21 : vector<8x1024xf32>
    %cst_6 = arith.constant 0.000000e+00 : f32
    %23 = vector.broadcast %cst_6 : f32 to vector<8x1024xf32>
    %24 = arith.select %19, %22, %23 : vector<8x1024xi1>, vector<8x1024xf32>
    %25 = vector.broadcast %6 : f32 to vector<8x1024xf32>
    %26 = arith.mulf %24, %25 : vector<8x1024xf32>
    %c0_7 = arith.constant 0 : index
    %c0_8 = arith.constant 0 : index
    %c0_9 = arith.constant 0 : index
    %27 = vector.load %arg5[%c0_7, %c0_8, %c0_9] : memref<1x8x1024xf32, #tpu.memory_space<vmem>>, vector<1x8x1024xf32>
    %28 = vector.shape_cast %27 : vector<1x8x1024xf32> to vector<8x1024xf32>
    %29 = arith.subf %28, %26 : vector<8x1024xf32>
    %30 = math.absf %29 : vector<8x1024xf32>
    %31 = vector.shape_cast %30 : vector<8x1024xf32> to vector<1x8x1024xf32>
    %cst_10 = arith.constant dense<0.000000e+00> : vector<8x1024xf32>
    %32 = vector.multi_reduction <add>, %31, %cst_10 [0] : vector<1x8x1024xf32> to vector<8x1024xf32>
    %c0_11 = arith.constant 0 : index
    %c0_12 = arith.constant 0 : index
    %33 = vector.load %arg7[%c0_11, %c0_12] : memref<8x1024xf32, #tpu.memory_space<vmem>>, vector<8x1024xf32>
    %34 = arith.addf %33, %32 : vector<8x1024xf32>
    %c0_13 = arith.constant 0 : index
    %c0_14 = arith.constant 0 : index
    %35 = vector.load %arg7[%c0_13, %c0_14] : memref<8x1024xf32, #tpu.memory_space<vmem>>, vector<8x1024xf32>
    tpu.vector_store %arg7[%c0_13, %c0_14], %34 {strides = array<i32>} : memref<8x1024xf32, #tpu.memory_space<vmem>>, vector<8x1024xf32>,
    %c3_i32 = arith.constant 3 : i32
    %36 = arith.cmpi eq, %arg1, %c3_i32 : i32
    %37 = arith.extui %36 : i1 to i32
    %c0_i32_15 = arith.constant 0 : i32
    %38 = arith.cmpi ne, %37, %c0_i32_15 : i32
    scf.if %38 {
      %c0_16 = arith.constant 0 : index
      %c0_17 = arith.constant 0 : index
      %39 = vector.load %arg7[%c0_16, %c0_17] : memref<8x1024xf32, #tpu.memory_space<vmem>>, vector<8x1024xf32>
      %40 = vector.shape_cast %39 : vector<8x1024xf32> to vector<1x8x1024xf32>
      %cst_18 = arith.constant dense<0.000000e+00> : vector<1xf32>
      %41 = vector.multi_reduction <add>, %40, %cst_18 [1, 2] : vector<1x8x1024xf32> to vector<1xf32>
      %42 = vector.shape_cast %41 : vector<1xf32> to vector<1x1x1xf32>
      %43 = vector.extract %42[0, 0, 0] : f32 from vector<1x1x1xf32>
      %44 = vector.broadcast %43 : f32 to vector<1x128xf32>
      %c0_19 = arith.constant 0 : index
      %c0_20 = arith.constant 0 : index
      %c0_21 = arith.constant 0 : index
      %45 = vector.load %arg6[%c0_19, %c0_20, %c0_21] : memref<1x1x128xf32, #tpu.memory_space<vmem>>, vector<1x1x128xf32>
      %46 = vector.shape_cast %45 : vector<1x1x128xf32> to vector<1x128xf32>
      %47 = vector.shape_cast %44 : vector<1x128xf32> to vector<1x1x128xf32>
      tpu.vector_store %arg6[%c0_19, %c0_20, %c0_21], %47 {strides = array<i32>} : memref<1x1x128xf32, #tpu.memory_space<vmem>>, vector<1x1x128xf32>,
    } else {
    }
    return
  }
  func.func @transform_0(%arg0: i32, %arg1: i32) -> (i32, i32) {
    %c0_i32 = arith.constant 0 : i32
    %c0_i32_0 = arith.constant 0 : i32
    %c0_i32_1 = arith.constant 0 : i32
    return %c0_i32, %c0_i32_0 : i32, i32
  }
  func.func @transform_1(%arg0: i32, %arg1: i32) -> (i32, i32) {
    %c0_i32 = arith.constant 0 : i32
    %c0_i32_0 = arith.constant 0 : i32
    %c0_i32_1 = arith.constant 0 : i32
    return %c0_i32, %c0_i32_0 : i32, i32
  }
  func.func @transform_2(%arg0: i32, %arg1: i32) -> (i32, i32, i32) {
    %c0_i32 = arith.constant 0 : i32
    %c0_i32_0 = arith.constant 0 : i32
    %c0_i32_1 = arith.constant 0 : i32
    return %arg0, %c0_i32, %c0_i32_0 : i32, i32, i32
  }
  func.func @transform_3(%arg0: i32, %arg1: i32) -> (i32, i32, i32) {
    %c0_i32 = arith.constant 0 : i32
    %c0_i32_0 = arith.constant 0 : i32
    return %arg0, %arg1, %c0_i32 : i32, i32, i32
  }
  func.func @transform_4(%arg0: i32, %arg1: i32) -> (i32, i32, i32) {
    %c0_i32 = arith.constant 0 : i32
    %c0_i32_0 = arith.constant 0 : i32
    %c0_i32_1 = arith.constant 0 : i32
    return %arg0, %c0_i32, %c0_i32_0 : i32, i32, i32
  }
}

</mosaic_0001>

<llo_original>
// kernel: tpu_custom_call.1
$region0: #{tpu_custom_call.1}
  #allocation0 [shape = 'u32[]', space=smem, size = 0x4, offset = 0x4, fixed_abs, tag = 'smem constant byte address 0x4 - core index']
  #allocation1 [shape = 'u32[144,128]{1,0:T(1,128)}', space=vmem, size = 0x12000, scoped, tag = 'internal scratch']
  #allocation2 [shape = 'f32[8,1024]{1,0:T(8,128)}', space=vmem, size = 0x8000, scoped, tag = 'scratch operand']
  %s0 = inlined_call_operand.vmem [shape: s32[3,1], index: 0, kind: input, shape index: {}]
  %s1 = inlined_call_operand.vmem [shape: f32[3,1], index: 1, kind: input, shape index: {}]
  %s2 = inlined_call_operand.hbm [shape: f32[3,1,1024], index: 2, kind: input, shape index: {}]
  %s3 = inlined_call_operand.hbm [shape: f32[3,32,1024], index: 3, kind: input, shape index: {}]
  %s4 = inlined_call_operand.hbm [shape: f32[3,1,128], index: 4, kind: output, shape index: {}]
  %s5 = sld [smem:[#allocation0]]
  $region73: #{tpu_custom_call.1} parent=0
    _
  %s7 = ssub.s32 1, %s5
  %s8 = scalar_select 0, %s7, %s5
  $region1: #{tpu_custom_call.1} parent=0
    #allocation3 [shape = 'u8[2048]{0}', space=smem, size = 0x800, scoped, tag = 'input window, operand 0, single buffered']
    #allocation4 [shape = 's32[2]{0}', space=sflag, size = 0x8, scoped, tag = 'scoped memory for tpu_custom_call.1']
    #allocation5 [shape = 's32[2]{0}', space=sflag, size = 0x8, scoped, tag = 'scoped memory for tpu_custom_call.1']
    #allocation6 [shape = 's32[2]{0}', space=sflag, size = 0x8, scoped, tag = 'scoped memory for tpu_custom_call.1']
    #allocation7 [shape = 'u8[2048]{0}', space=smem, size = 0x800, scoped, tag = 'input window, operand 1, single buffered']
    #allocation8 [shape = 's32[1]{0}', space=sflag, size = 0x4, scoped, tag = 'scoped memory for tpu_custom_call.1']
    #allocation9 [shape = 'u8[8192]{0}', space=vmem, size = 0x2000, scoped, tag = 'input window, operand 2']
    #allocation10 [shape = 'u8[65536]{0}', space=vmem, size = 0x10000, scoped, tag = 'input window, operand 3']
    #allocation11 [shape = 's32[2]{0}', space=sflag, size = 0x8, scoped, tag = 'scoped memory for tpu_custom_call.1']
    #allocation12 [shape = 'u8[1024]{0}', space=vmem, size = 0x400, scoped, tag = 'output window, operand 0']
    %9 = vsyncpa [#allocation6], 0
    %10 = vsyncpa [#allocation8], 0
    %11 = vsyncpa [#allocation4], 0
    %s12 = scalar_lea.sflag [#allocation4], 1
    %13 = vsyncpa %s12, 0
    %14 = vsyncpa [#allocation11], 0
    %s15 = scalar_lea.sflag [#allocation11], 1
    %16 = vsyncpa %s15, 0
    %17 = vsyncpa [#allocation5], 0
    %s18 = scalar_lea.sflag [#allocation5], 1
    %19 = vsyncpa %s18, 0
    loop: start=0, step=1, limit=14
    $region2: #{tpu_custom_call.1} parent=1 // loop_pre_header
      _
    $region3: #{tpu_custom_call.1} parent=1 // loop_header
      %s21 = sphi 0, %s25
      %p22 = scmp.ge.s32.totalorder %s21, 14
      %s28 = sphi 0, %s40
      %s29 = sphi 0, %s36
      %s30 = sphi 0, %s28
      %s31 = sphi 0, %s29
      %s32 = sphi 0, %s30
      %s33 = sphi 0, %s31
      %s41 = sphi 0, %s41
      %s43 = sphi 0, %s41
      %s44 = sphi 0, %s43
      %s58 = sphi 0, %s44
      %s62 = sphi 0, %s62
      %s64 = sphi 0, %s62
      %s65 = sphi 0, %s64
      %s79 = sphi 0, %s65
      %s85 = sphi 0, %s87
      %s88 = sphi 0, %s85
      %s89 = sphi 0, %s88
      %s105 = sphi 0, %s89
      %s113 = sphi 0, %s115
      %s116 = sphi 0, %s113
      %s117 = sphi 0, %s116
      %s133 = sphi 0, %s117
      %s139 = sphi 0, %s141
      %s142 = sphi 0, %s139
      %s143 = sphi 0, %s142
      %s159 = sphi 0, %s143
    $region4: #{tpu_custom_call.1} parent=1 // loop_header_branch
      %24 = sbr.rel (%p22) target = $region8
    $region5: #{tpu_custom_call.1} parent=1 // loop_body
      %s26 = ssub.s32 %s21, 1
      %s27 = ssub.s32 %s21, 2
      %s34 = sadd.s32 1, %s29
      %p35 = scmp.ge.s32.totalorder %s34, 4
      %s36 = scalar_select %p35, 0, %s34
      %s37 = sadd.s32 1, %s28
      %s38 = scalar_select %p35, %s37, %s28
      %p39 = scmp.ge.s32.totalorder %s38, 3
      %s40 = scalar_select %p39, 0, %s38
      %s42 = sadd.s32 %s41, 1
      %p45 = scmp.eq.s32.totalorder %s21, 11
      %p46 = scmp.ne.s32.totalorder %s41, %s43
      %p47 = scmp.eq.s32.totalorder %s21, 0
      %p48 = por %p46, %p47
      %p49 = scmp.ne.s32.totalorder %s41, %s43
      %p50 = scmp.eq.s32.totalorder %s26, 11
      %p51 = por %p49, %p50
      %p52 = scmp.ne.s32.totalorder %s43, %s44
      %p53 = scmp.eq.s32.totalorder %s26, 0
      %p54 = por %p52, %p53
      %p55 = scmp.ne.s32.totalorder %s43, %s44
      %p56 = scmp.eq.s32.totalorder %s27, 11
      %p57 = por %p55, %p56
      %p59 = scmp.ne.s32.totalorder %s44, %s58
      %p60 = scmp.eq.s32.totalorder %s27, 0
      %p61 = por %p59, %p60
      %s63 = sadd.s32 %s62, 1
      %p66 = scmp.eq.s32.totalorder %s21, 11
      %p67 = scmp.ne.s32.totalorder %s62, %s64
      %p68 = scmp.eq.s32.totalorder %s21, 0
      %p69 = por %p67, %p68
      %p70 = scmp.ne.s32.totalorder %s62, %s64
      %p71 = scmp.eq.s32.totalorder %s26, 11
      %p72 = por %p70, %p71
      %p73 = scmp.ne.s32.totalorder %s64, %s65
      %p74 = scmp.eq.s32.totalorder %s26, 0
      %p75 = por %p73, %p74
      %p76 = scmp.ne.s32.totalorder %s64, %s65
      %p77 = scmp.eq.s32.totalorder %s27, 11
      %p78 = por %p76, %p77
      %p80 = scmp.ne.s32.totalorder %s65, %s79
      %p81 = scmp.eq.s32.totalorder %s27, 0
      %p82 = por %p80, %p81
      %s83 = ssub.s32 %s28, %s40
      %p84 = scmp.eq.s32.totalorder %s83, 0
      %s86 = sadd.s32 %s85, 1
      %s87 = scalar_select %p84, %s85, %s86
      %p90 = pneg %p84
      %p91 = scmp.eq.s32.totalorder %s21, 11
      %p92 = por %p90, %p91
      %p93 = scmp.ne.s32.totalorder %s85, %s88
      %p94 = scmp.eq.s32.totalorder %s21, 0
      %p95 = por %p93, %p94
      %p96 = scmp.ne.s32.totalorder %s85, %s88
      %p97 = scmp.eq.s32.totalorder %s26, 11
      %p98 = por %p96, %p97
      %p99 = scmp.ne.s32.totalorder %s88, %s89
      %p100 = scmp.eq.s32.totalorder %s26, 0
      %p101 = por %p99, %p100
      %p102 = scmp.ne.s32.totalorder %s88, %s89
      %p103 = scmp.eq.s32.totalorder %s27, 11
      %p104 = por %p102, %p103
      %p106 = scmp.ne.s32.totalorder %s89, %s105
      %p107 = scmp.eq.s32.totalorder %s27, 0
      %p108 = por %p106, %p107
      %s109 = ssub.s32 %s28, %s40
      %s110 = ssub.s32 %s29, %s36
      %s111 = sor.u32 %s109, %s110
      %p112 = scmp.eq.s32.totalorder %s111, 0
      %s114 = sadd.s32 %s113, 1
      %s115 = scalar_select %p112, %s113, %s114
      %p118 = pneg %p112
      %p119 = scmp.eq.s32.totalorder %s21, 11
      %p120 = por %p118, %p119
      %p121 = scmp.ne.s32.totalorder %s113, %s116
      %p122 = scmp.eq.s32.totalorder %s21, 0
      %p123 = por %p121, %p122
      %p124 = scmp.ne.s32.totalorder %s113, %s116
      %p125 = scmp.eq.s32.totalorder %s26, 11
      %p126 = por %p124, %p125
      %p127 = scmp.ne.s32.totalorder %s116, %s117
      %p128 = scmp.eq.s32.totalorder %s26, 0
      %p129 = por %p127, %p128
      %p130 = scmp.ne.s32.totalorder %s116, %s117
      %p131 = scmp.eq.s32.totalorder %s27, 11
      %p132 = por %p130, %p131
      %p134 = scmp.ne.s32.totalorder %s117, %s133
      %p135 = scmp.eq.s32.totalorder %s27, 0
      %p136 = por %p134, %p135
      %s137 = ssub.s32 %s28, %s40
      %p138 = scmp.eq.s32.totalorder %s137, 0
      %s140 = sadd.s32 %s139, 1
      %s141 = scalar_select %p138, %s139, %s140
      %p144 = pneg %p138
      %p145 = scmp.eq.s32.totalorder %s21, 11
      %p146 = por %p144, %p145
      %p147 = scmp.ne.s32.totalorder %s139, %s142
      %p148 = scmp.eq.s32.totalorder %s21, 0
      %p149 = por %p147, %p148
      %p150 = scmp.ne.s32.totalorder %s139, %s142
      %p151 = scmp.eq.s32.totalorder %s26, 11
      %p152 = por %p150, %p151
      %p153 = scmp.ne.s32.totalorder %s142, %s143
      %p154 = scmp.eq.s32.totalorder %s26, 0
      %p155 = por %p153, %p154
      %p156 = scmp.ne.s32.totalorder %s142, %s143
      %p157 = scmp.eq.s32.totalorder %s27, 11
      %p158 = por %p156, %p157
      %p160 = scmp.ne.s32.totalorder %s143, %s159
      %p161 = scmp.eq.s32.totalorder %s27, 0
      %p162 = por %p160, %p161
      %p163 = scmp.le.s32.totalorder 1, %s21
      %p164 = scmp.lt.s32.totalorder %s21, 13
      %p165 = pnand %p163, %p164
      %p166 = pneg %p165
      // Predicated region
      $region9: #{tpu_custom_call.1} parent=5 // pred_check
        _
      $region10: #{tpu_custom_call.1} parent=5 // pred_check_branch
        %168 = sbr.rel (%p165) target = $region12
      $region11: #{tpu_custom_call.1} parent=5 // pred_region
        %s169 = ssub.s32 %s21, 1
        // Predicated region
        $region13: #{tpu_custom_call.1} parent=11 // pred_check
          %p170 = pneg %p54
        $region14: #{tpu_custom_call.1} parent=11 // pred_check_branch
          %172 = sbr.rel (%p170) target = $region16
        $region15: #{tpu_custom_call.1} parent=11 // pred_region
          %s174 = ssub.s32 64, 64
          %175 = vsyncadd [#allocation6], %s174
          %s177 = sshll.u32 %s0, 4
          %s178 = int_to_ptr.vmem [resolvable:$true] %s177
          %180 = dma.vmem_to_smem %s178, 64, [#allocation3], [#allocation6]
        $region16: #{tpu_custom_call.1} parent=11 // pred_fallthru
          _
        // Predicated region
        $region17: #{tpu_custom_call.1} parent=11 // pred_check
          %p181 = pneg %p75
        $region18: #{tpu_custom_call.1} parent=11 // pred_check_branch
          %183 = sbr.rel (%p181) target = $region20
        $region19: #{tpu_custom_call.1} parent=11 // pred_region
          %s185 = ssub.s32 64, 64
          %186 = vsyncadd [#allocation8], %s185
          %s188 = sshll.u32 %s1, 4
          %s189 = int_to_ptr.vmem [resolvable:$true] %s188
          %191 = dma.vmem_to_smem %s189, 64, [#allocation7], [#allocation8]
        $region20: #{tpu_custom_call.1} parent=11 // pred_fallthru
          _
      $region12: #{tpu_custom_call.1} parent=5 // pred_fallthru
        _
      %p192 = scmp.lt.s32.totalorder %s21, 12
      // Predicated region
      $region21: #{tpu_custom_call.1} parent=5 // pred_check
        %p193 = pneg %p192
      $region22: #{tpu_custom_call.1} parent=5 // pred_check_branch
        %195 = sbr.rel (%p193) target = $region24
      $region23: #{tpu_custom_call.1} parent=5 // pred_region
        // Predicated region
        $region25: #{tpu_custom_call.1} parent=23 // pred_check
          %p196 = pneg %p95
        $region26: #{tpu_custom_call.1} parent=23 // pred_check_branch
          %198 = sbr.rel (%p196) target = $region28
        $region27: #{tpu_custom_call.1} parent=23 // pred_region
          %s199 = sand.u32 %s85, 1
          %s200 = scalar_lea.sflag [#allocation4], %s199
          %s201 = sand.u32 %s85, 1
          %s202 = smul.addr %s201, 8
          %s203 = scalar_lea.vmem [#allocation9], %s202
          %s205 = ssub.s32 128, 128
          %206 = vsyncadd %s200, %s205
          %s207 = smul.addr %s28, 8
          %s208 = smul.addr %s207, 16
          %s209 = scalar_lea.hbm %s2, %s208
          %s211 = sshll.u32 %s203, 4
          %s212 = int_to_ptr.vmem [resolvable:$true] %s211
          %214 = dma.hbm_to_vmem [thread:$0]  %s209, 128, %s212, %s200
        $region28: #{tpu_custom_call.1} parent=23 // pred_fallthru
          _
        // Predicated region
        $region29: #{tpu_custom_call.1} parent=23 // pred_check
          %p215 = pneg %p123
        $region30: #{tpu_custom_call.1} parent=23 // pred_check_branch
          %217 = sbr.rel (%p215) target = $region32
        $region31: #{tpu_custom_call.1} parent=23 // pred_region
          %s218 = sand.u32 %s113, 1
          %s219 = scalar_lea.sflag [#allocation11], %s218
          %s220 = sand.u32 %s113, 1
          %s221 = smul.addr %s220, 64
          %s222 = scalar_lea.vmem [#allocation10], %s221
          %s224 = ssub.s32 1024, 1024
          %225 = vsyncadd %s219, %s224
          %s226 = smul.addr %s29, 8
          %s227 = smul.addr %s28, 32
          %s228 = sadd.s32 %s226, %s227
          %s229 = smul.addr %s228, 128
          %s230 = scalar_lea.hbm %s3, %s229
          %s232 = sshll.u32 %s222, 4
          %s233 = int_to_ptr.vmem [resolvable:$true] %s232
          %235 = dma.hbm_to_vmem [thread:$0]  %s230, 1024, %s233, %s219
        $region32: #{tpu_custom_call.1} parent=23 // pred_fallthru
          _
      $region24: #{tpu_custom_call.1} parent=5 // pred_fallthru
        _
      %p236 = scmp.le.s32.totalorder 1, %s21
      %p237 = scmp.lt.s32.totalorder %s21, 13
      %p238 = pnand %p236, %p237
      %p239 = pneg %p238
      // Predicated region
      $region33: #{tpu_custom_call.1} parent=5 // pred_check
        _
      $region34: #{tpu_custom_call.1} parent=5 // pred_check_branch
        %241 = sbr.rel (%p238) target = $region36
      $region35: #{tpu_custom_call.1} parent=5 // pred_region
        %s242 = ssub.s32 %s21, 1
        // Predicated region
        $region37: #{tpu_custom_call.1} parent=35 // pred_check
          %p243 = pneg %p54
        $region38: #{tpu_custom_call.1} parent=35 // pred_check_branch
          %245 = sbr.rel (%p243) target = $region40
        $region39: #{tpu_custom_call.1} parent=35 // pred_region
          %246 = dma.done [#allocation6], 64
        $region40: #{tpu_custom_call.1} parent=35 // pred_fallthru
          _
        // Predicated region
        $region41: #{tpu_custom_call.1} parent=35 // pred_check
          %p247 = pneg %p75
        $region42: #{tpu_custom_call.1} parent=35 // pred_check_branch
          %249 = sbr.rel (%p247) target = $region44
        $region43: #{tpu_custom_call.1} parent=35 // pred_region
          %250 = dma.done [#allocation8], 64
        $region44: #{tpu_custom_call.1} parent=35 // pred_fallthru
          _
        %s251 = sand.u32 %s88, 1
        %s252 = scalar_lea.sflag [#allocation4], %s251
        %s253 = sand.u32 %s88, 1
        %s254 = smul.addr %s253, 8
        %s255 = scalar_lea.vmem [#allocation9], %s254
        // Predicated region
        $region45: #{tpu_custom_call.1} parent=35 // pred_check
          %p256 = pneg %p101
        $region46: #{tpu_custom_call.1} parent=35 // pred_check_branch
          %258 = sbr.rel (%p256) target = $region48
        $region47: #{tpu_custom_call.1} parent=35 // pred_region
          %259 = dma.done %s252, 128
        $region48: #{tpu_custom_call.1} parent=35 // pred_fallthru
          _
        %s260 = sand.u32 %s116, 1
        %s261 = scalar_lea.sflag [#allocation11], %s260
        %s262 = sand.u32 %s116, 1
        %s263 = smul.addr %s262, 64
        %s264 = scalar_lea.vmem [#allocation10], %s263
        // Predicated region
        $region49: #{tpu_custom_call.1} parent=35 // pred_check
          %p265 = pneg %p129
        $region50: #{tpu_custom_call.1} parent=35 // pred_check_branch
          %267 = sbr.rel (%p265) target = $region52
        $region51: #{tpu_custom_call.1} parent=35 // pred_region
          %268 = dma.done %s261, 1024
        $region52: #{tpu_custom_call.1} parent=35 // pred_fallthru
          _
        %269 = sfence
        %p270 = pneg %p54
        %p271 = pneg %p51
        %p272 = pneg %p75
        %p273 = pneg %p72
        %s274 = sand.u32 %s88, 1
        %s275 = scalar_lea.sflag [#allocation4], %s274
        %s276 = sand.u32 %s88, 1
        %s277 = smul.addr %s276, 8
        %s278 = scalar_lea.vmem [#allocation9], %s277
        %p279 = pneg %p101
        %p280 = pneg %p98
        %s281 = sand.u32 %s116, 1
        %s282 = scalar_lea.sflag [#allocation11], %s281
        %s283 = sand.u32 %s116, 1
        %s284 = smul.addr %s283, 64
        %s285 = scalar_lea.vmem [#allocation10], %s284
        %p286 = pneg %p129
        %p287 = pneg %p126
        %p288 = pneg %p155
        %p289 = pneg %p152
        %s290 = sand.u32 %s142, 1
        %s291 = scalar_lea.sflag [#allocation5], %s290
        %s292 = sand.u32 %s142, 1
        %s293 = scalar_lea.vmem [#allocation12], %s292
        %p294 = scmp.eq.s32.totalorder %s31, 0
        // Predicated region
        $region53: #{tpu_custom_call.1} parent=35 // pred_check
          %p295 = pneg %p294
        $region54: #{tpu_custom_call.1} parent=35 // pred_check_branch
          %297 = sbr.rel (%p295) target = $region56
        $region55: #{tpu_custom_call.1} parent=35 // pred_region
          %298 = vst [vmem:[#allocation2] sm:$0xff] 0.0
          %299 = vst [vmem:[#allocation2 + $0x8] sm:$0xff] 0.0
          %300 = vst [vmem:[#allocation2 + $0x10] sm:$0xff] 0.0
          %301 = vst [vmem:[#allocation2 + $0x18] sm:$0xff] 0.0
          %302 = vst [vmem:[#allocation2 + $0x20] sm:$0xff] 0.0
          %303 = vst [vmem:[#allocation2 + $0x28] sm:$0xff] 0.0
          %304 = vst [vmem:[#allocation2 + $0x30] sm:$0xff] 0.0
          %305 = vst [vmem:[#allocation2 + $0x38] sm:$0xff] 0.0
        $region56: #{tpu_custom_call.1} parent=35 // pred_fallthru
          _
        %s306 = smul.u32 %s30, 128
        %s307 = sld [smem:[#allocation3 + %s306]]
        %s308 = sld [smem:[#allocation7 + %s306]]
        %v309 = vlaneseq
        %v310 = vshrl.u32 %v309, 7
        %s311 = smul.u32 %s31, 8
        %s312 = ssub.s32 %s311, %s307
        %v313 = vstv %s312
        %v314 = vadd.s32 %v310, %v313
        %v315 = vcvt.s32.f32 %v314
        %v316 = vmul.f32 %v315, %v315
        %v317 = vld [vmem:[%s255] sm:$0xff]
        %v319 = vlaneseq
        %v320 = vshrl.u32 %v319, 7
        %v321 = vsub.s32 0, %v320
        %v322 = vrot.slane %v317, %v321
        %v323 = vlaneseq
        %v324 = vshrl.u32 %v323, 7
        %v325 = vsub.s32 1, %v324
        %v326 = vrot.slane %v317, %v325
        %v327 = vlaneseq
        %v328 = vshrl.u32 %v327, 7
        %v329 = vsub.s32 2, %v328
        %v330 = vrot.slane %v317, %v329
        %v331 = vlaneseq
        %v332 = vshrl.u32 %v331, 7
        %v333 = vsub.s32 3, %v332
        %v334 = vrot.slane %v317, %v333
        %v335 = vlaneseq
        %v336 = vshrl.u32 %v335, 7
        %v337 = vsub.s32 4, %v336
        %v338 = vrot.slane %v317, %v337
        %v339 = vlaneseq
        %v340 = vshrl.u32 %v339, 7
        %v341 = vsub.s32 5, %v340
        %v342 = vrot.slane %v317, %v341
        %v343 = vlaneseq
        %v344 = vshrl.u32 %v343, 7
        %v345 = vsub.s32 6, %v344
        %v346 = vrot.slane %v317, %v345
        %v347 = vlaneseq
        %v348 = vshrl.u32 %v347, 7
        %v349 = vsub.s32 7, %v348
        %v350 = vrot.slane %v317, %v349
        %v359 = vadd.f32 %v316, %v322
        %v360 = vadd.f32 %v316, %v326
        %v361 = vadd.f32 %v316, %v330
        %v362 = vadd.f32 %v316, %v334
        %v363 = vadd.f32 %v316, %v338
        %v364 = vadd.f32 %v316, %v342
        %v365 = vadd.f32 %v316, %v346
        %v366 = vadd.f32 %v316, %v350
        %vm367 = vcmp.le.f32.partialorder %v359, 441.0
        %vm368 = vcmp.le.f32.partialorder %v360, 441.0
        %vm369 = vcmp.le.f32.partialorder %v361, 441.0
        %vm370 = vcmp.le.f32.partialorder %v362, 441.0
        %vm371 = vcmp.le.f32.partialorder %v363, 441.0
        %vm372 = vcmp.le.f32.partialorder %v364, 441.0
        %vm373 = vcmp.le.f32.partialorder %v365, 441.0
        %vm374 = vcmp.le.f32.partialorder %v366, 441.0
        %v375 = vmul.f32 %v359, -0.125
        %v376 = vmul.f32 %v360, -0.125
        %v377 = vmul.f32 %v361, -0.125
        %v378 = vmul.f32 %v362, -0.125
        %v379 = vmul.f32 %v363, -0.125
        %v380 = vmul.f32 %v364, -0.125
        %v381 = vmul.f32 %v365, -0.125
        %v382 = vmul.f32 %v366, -0.125
        %v383 = vmul.f32 %v375, 1.442695
        %v384 = vpow.pop %v383
        %v385 = vmul.f32 %v376, 1.442695
        %v386 = vpow.pop %v385
        %v387 = vmul.f32 %v377, 1.442695
        %v388 = vpow.pop %v387
        %v389 = vmul.f32 %v378, 1.442695
        %v390 = vpow.pop %v389
        %v391 = vmul.f32 %v379, 1.442695
        %v392 = vpow.pop %v391
        %v393 = vmul.f32 %v380, 1.442695
        %v394 = vpow.pop %v393
        %v395 = vmul.f32 %v381, 1.442695
        %v396 = vpow.pop %v395
        %v397 = vmul.f32 %v382, 1.442695
        %v398 = vpow.pop %v397
        %v399 = vsel %vm367, %v384, 0.0
        %v400 = vsel %vm368, %v386, 0.0
        %v401 = vsel %vm369, %v388, 0.0
        %v402 = vsel %vm370, %v390, 0.0
        %v403 = vsel %vm371, %v392, 0.0
        %v404 = vsel %vm372, %v394, 0.0
        %v405 = vsel %vm373, %v396, 0.0
        %v406 = vsel %vm374, %v398, 0.0
        %v407 = vstv %s308
        %v408 = vmul.f32 %v399, %v407
        %v409 = vmul.f32 %v400, %v407
        %v410 = vmul.f32 %v401, %v407
        %v411 = vmul.f32 %v402, %v407
        %v412 = vmul.f32 %v403, %v407
        %v413 = vmul.f32 %v404, %v407
        %v414 = vmul.f32 %v405, %v407
        %v415 = vmul.f32 %v406, %v407
        %v416 = vld [vmem:[%s264] sm:$0xff]
        %v417 = vld [vmem:[%s264 + $0x8] sm:$0xff]
        %v418 = vld [vmem:[%s264 + $0x10] sm:$0xff]
        %v419 = vld [vmem:[%s264 + $0x18] sm:$0xff]
        %v420 = vld [vmem:[%s264 + $0x20] sm:$0xff]
        %v421 = vld [vmem:[%s264 + $0x28] sm:$0xff]
        %v422 = vld [vmem:[%s264 + $0x30] sm:$0xff]
        %v423 = vld [vmem:[%s264 + $0x38] sm:$0xff]
        %v424 = vsub.f32 %v416, %v408
        %v425 = vsub.f32 %v417, %v409
        %v426 = vsub.f32 %v418, %v410
        %v427 = vsub.f32 %v419, %v411
        %v428 = vsub.f32 %v420, %v412
        %v429 = vsub.f32 %v421, %v413
        %v430 = vsub.f32 %v422, %v414
        %v431 = vsub.f32 %v423, %v415
        %v432 = vand.u32 2147483647, %v424
        %v433 = vand.u32 2147483647, %v425
        %v434 = vand.u32 2147483647, %v426
        %v435 = vand.u32 2147483647, %v427
        %v436 = vand.u32 2147483647, %v428
        %v437 = vand.u32 2147483647, %v429
        %v438 = vand.u32 2147483647, %v430
        %v439 = vand.u32 2147483647, %v431
        %v440 = vadd.f32 %v432, 0.0
        %v441 = vadd.f32 %v433, 0.0
        %v442 = vadd.f32 %v434, 0.0
        %v443 = vadd.f32 %v435, 0.0
        %v444 = vadd.f32 %v436, 0.0
        %v445 = vadd.f32 %v437, 0.0
        %v446 = vadd.f32 %v438, 0.0
        %v447 = vadd.f32 %v439, 0.0
        %v448 = vld [vmem:[#allocation2] sm:$0xff]
        %v449 = vld [vmem:[#allocation2 + $0x8] sm:$0xff]
        %v450 = vld [vmem:[#allocation2 + $0x10] sm:$0xff]
        %v451 = vld [vmem:[#allocation2 + $0x18] sm:$0xff]
        %v452 = vld [vmem:[#allocation2 + $0x20] sm:$0xff]
        %v453 = vld [vmem:[#allocation2 + $0x28] sm:$0xff]
        %v454 = vld [vmem:[#allocation2 + $0x30] sm:$0xff]
        %v455 = vld [vmem:[#allocation2 + $0x38] sm:$0xff]
        %v456 = vadd.f32 %v448, %v440
        %v457 = vadd.f32 %v449, %v441
        %v458 = vadd.f32 %v450, %v442
        %v459 = vadd.f32 %v451, %v443
        %v460 = vadd.f32 %v452, %v444
        %v461 = vadd.f32 %v453, %v445
        %v462 = vadd.f32 %v454, %v446
        %v463 = vadd.f32 %v455, %v447
        %464 = vst [vmem:[#allocation2] sm:$0xff] %v456
        %465 = vst [vmem:[#allocation2 + $0x8] sm:$0xff] %v457
        %466 = vst [vmem:[#allocation2 + $0x10] sm:$0xff] %v458
        %467 = vst [vmem:[#allocation2 + $0x18] sm:$0xff] %v459
        %468 = vst [vmem:[#allocation2 + $0x20] sm:$0xff] %v460
        %469 = vst [vmem:[#allocation2 + $0x28] sm:$0xff] %v461
        %470 = vst [vmem:[#allocation2 + $0x30] sm:$0xff] %v462
        %471 = vst [vmem:[#allocation2 + $0x38] sm:$0xff] %v463
        %p472 = scmp.eq.s32.totalorder %s31, 3
        // Predicated region
        $region57: #{tpu_custom_call.1} parent=35 // pred_check
          %p473 = pneg %p472
        $region58: #{tpu_custom_call.1} parent=35 // pred_check_branch
          %475 = sbr.rel (%p473) target = $region60
        $region59: #{tpu_custom_call.1} parent=35 // pred_region
          %v476 = vld [vmem:[#allocation2] sm:$0xff]
          %v477 = vld [vmem:[#allocation2 + $0x8] sm:$0xff]
          %v478 = vld [vmem:[#allocation2 + $0x10] sm:$0xff]
          %v479 = vld [vmem:[#allocation2 + $0x18] sm:$0xff]
          %v480 = vld [vmem:[#allocation2 + $0x20] sm:$0xff]
          %v481 = vld [vmem:[#allocation2 + $0x28] sm:$0xff]
          %v482 = vld [vmem:[#allocation2 + $0x30] sm:$0xff]
          %v483 = vld [vmem:[#allocation2 + $0x38] sm:$0xff]
          %v484 = vadd.f32 %v476, %v477
          %v485 = vadd.f32 %v484, %v478
          %v486 = vadd.f32 %v485, %v479
          %v487 = vadd.f32 %v486, %v480
          %v488 = vadd.f32 %v487, %v481
          %v489 = vadd.f32 %v488, %v482
          %v490 = vadd.f32 %v489, %v483
          %491 = vadd.xlane.f32.xlu0 %v490
          %v492 = vpop.xlane.xlu0 %491
          %v493 = vrot.slane %v492, 4
          %v494 = vadd.f32 %v492, %v493
          %v495 = vrot.slane %v494, 2
          %v496 = vadd.f32 %v494, %v495
          %v497 = vrot.slane %v496, 1
          %v498 = vadd.f32 %v496, %v497
          %s499 = vtos %v498
          %v500 = vstv %s499
          %501 = vst [vmem:[%s293] sm:$0x1] %v500
        $region60: #{tpu_custom_call.1} parent=35 // pred_fallthru
          _
        %s502 = sand.u32 %s142, 1
        %s503 = scalar_lea.sflag [#allocation5], %s502
        %s504 = sand.u32 %s142, 1
        %s505 = scalar_lea.vmem [#allocation12], %s504
        // Predicated region
        $region61: #{tpu_custom_call.1} parent=35 // pred_check
          %p506 = pneg %p152
        $region62: #{tpu_custom_call.1} parent=35 // pred_check_branch
          %508 = sbr.rel (%p506) target = $region64
        $region63: #{tpu_custom_call.1} parent=35 // pred_region
          %s510 = ssub.s32 16, 16
          %511 = vsyncadd %s503, %s510
          %s512 = smul.addr %s30, 16
          %s513 = scalar_lea.hbm %s4, %s512
          %s515 = sshll.u32 %s505, 4
          %s516 = int_to_ptr.vmem [resolvable:$true] %s515
          %518 = dma.vmem_to_hbm [thread:$0]  %s516, 16, %s513, %s503
        $region64: #{tpu_custom_call.1} parent=35 // pred_fallthru
          _
      $region36: #{tpu_custom_call.1} parent=5 // pred_fallthru
        _
      %p519 = scmp.le.s32.totalorder 2, %s21
      // Predicated region
      $region65: #{tpu_custom_call.1} parent=5 // pred_check
        %p520 = pneg %p519
      $region66: #{tpu_custom_call.1} parent=5 // pred_check_branch
        %522 = sbr.rel (%p520) target = $region68
      $region67: #{tpu_custom_call.1} parent=5 // pred_region
        %s523 = ssub.s32 %s21, 2
        // Predicated region
        $region69: #{tpu_custom_call.1} parent=67 // pred_check
          %p524 = pneg %p158
        $region70: #{tpu_custom_call.1} parent=67 // pred_check_branch
          %526 = sbr.rel (%p524) target = $region72
        $region71: #{tpu_custom_call.1} parent=67 // pred_region
          %s527 = sand.u32 %s143, 1
          %s528 = scalar_lea.sflag [#allocation5], %s527
          %s529 = sand.u32 %s143, 1
          %s530 = scalar_lea.vmem [#allocation12], %s529
          %531 = dma.done %s528, 16
        $region72: #{tpu_custom_call.1} parent=67 // pred_fallthru
          _
      $region68: #{tpu_custom_call.1} parent=5 // pred_fallthru
        _
    $region6: #{tpu_custom_call.1} parent=1 // loop_footer
      %s25 = sadd.s32 1, %s21
    $region7: #{tpu_custom_call.1} parent=1 // loop_footer_branch
      %20 = sbr.rel target = $region3
    $region8: #{tpu_custom_call.1} parent=1 // loop_exit
      _
    %532 = vsyncpa [#allocation4], 1
    %s533 = scalar_lea.sflag [#allocation4], 1
    %534 = vsyncpa %s533, 1
    %535 = vsyncpa [#allocation11], 1
    %s536 = scalar_lea.sflag [#allocation11], 1
    %537 = vsyncpa %s536, 1
    %538 = vsyncpa [#allocation5], 1
    %s539 = scalar_lea.sflag [#allocation5], 1
    %540 = vsyncpa %s539, 1
    %541 = vsyncpa [#allocation6], 1
    %s542 = scalar_lea.sflag [#allocation6], 1
    %543 = vsyncpa %s542, 1
    %544 = vsyncpa [#allocation8], 1

</llo_original>
